<compile_context>
chip_gen: v7x
topology: tpu7x:2x2x1
jax: 0.10.0
libtpu: 0.0.40
codegen_flags: <defaults>
</compile_context>

<pallas_src>
import jax
import jax.numpy as jnp
from jax.experimental import pallas as pl
from jax.experimental.pallas import tpu as pltpu

HIDDEN = 768  # fixed by the module definition


def _prompt_add_kernel(prompt_ref, pos_ref, out_ref):
    # prompt_ref: (TM, HIDDEN) VMEM tile, pos_ref: (TM, 1) VMEM tile.
    # Single VPU broadcast add; cast keeps the store dtype-exact even if the
    # two parameters are passed with different dtypes.
    out_ref[...] = (prompt_ref[...] + pos_ref[...]).astype(out_ref.dtype)


def _row_cap_for_device():
    """Row-tile cap by VMEM capacity: 2048 on 128 MiB chips (v5e/v6e), else 1024.

    1024 rows x 768 x f32 = 3 MiB/block -> ~13 MiB with 2-deep buffering of
    prompt/out/pos, safe on v7x's 64 MiB physical VMEM.  2048-row (6 MiB)
    blocks shave a little per-step overhead where VMEM is plentiful.
    """
    try:
        info = pltpu.get_tpu_info()
        vmem_bytes = getattr(info, "vmem_capacity_bytes", 0) or 0
        if vmem_bytes >= (96 << 20):
            return 2048
    except Exception:
        pass
    return 1024


def _pick_block_rows(L, row_cap):
    """Fixed, 8-aligned row tile.

    Targets >= 4 grid steps when L allows it (keeps both v7x TensorCores fed
    and load-balanced), capped by `row_cap` for VMEM.  No divisibility
    requirement on L: the grid uses pl.cdiv and Pallas masks the ragged tail.
    """
    tm = (L // 4) // 8 * 8          # ~L/4, rounded down to a multiple of 8
    return max(8, min(row_cap, tm))


def token_prompter_w_pos_forward(prompt, pos_embedding, *, row_cap=None,
                                 small_l_threshold=512):
    """prompt: (1, L, 768), pos_embedding: (1, L, 1) -> (1, L, 768)."""
    assert prompt.ndim == 3 and prompt.shape[0] == 1 and prompt.shape[2] == HIDDEN
    L = prompt.shape[1]
    assert pos_embedding.shape == (1, L, 1)

    # Small-L fast path: for tiny prompts the pallas_call dispatch plus
    # per-step overhead exceeds the entire HBM transfer; XLA fuses this
    # broadcast add at roofline anyway.
    if L < small_l_threshold:
        return prompt + pos_embedding

    if row_cap is None:
        row_cap = _row_cap_for_device()

    # Squeeze the leading 1; keep hidden=768 on lanes (lane-dense output).
    prompt_2d = prompt.reshape(L, HIDDEN)
    pos_2d = pos_embedding.reshape(L, 1)

    tm = _pick_block_rows(L, row_cap)
    grid = (pl.cdiv(L, tm),)  # ragged last tile handled by Pallas masking

    # Scoped VMEM: 32 MiB covers 2-deep buffering of 3 MiB blocks on every
    # generation (raises v5e's 16 MiB default, matches v6e/v7x defaults);
    # 64 MiB when the 2048-row tiles are in play (only chosen on 128 MiB-VMEM
    # chips, so plenty of physical headroom remains).
    vmem_limit = (64 if row_cap >= 2048 else 32) * 1024 * 1024

    out_2d = pl.pallas_call(
        _prompt_add_kernel,
        out_shape=jax.ShapeDtypeStruct((L, HIDDEN), prompt.dtype),
        grid_spec=pltpu.PrefetchScalarGridSpec(
            num_scalar_prefetch=0,
            grid=grid,
            in_specs=[
                pl.BlockSpec((tm, HIDDEN), lambda i: (i, 0)),
                pl.BlockSpec((tm, 1), lambda i: (i, 0)),
            ],
            out_specs=pl.BlockSpec((tm, HIDDEN), lambda i: (i, 0)),
        ),
        compiler_params=pltpu.CompilerParams(
            # Row tiles are independent -> allow megacore sharding on
            # multi-TensorCore parts (v7x); no-op on single-TC v5e/v6e.
            dimension_semantics=("parallel",),
            vmem_limit_bytes=vmem_limit,
        ),
    )(prompt_2d, pos_2d)

    return out_2d.reshape(1, L, HIDDEN)


def _check(prompt_len, key, **kwargs):
    k_prompt, k_pos = jax.random.split(key)
    prompt = jax.random.normal(k_prompt, (1, prompt_len, HIDDEN), dtype=jnp.float32)
    pos_embedding = jax.random.normal(k_pos, (1, prompt_len, 1), dtype=jnp.float32)

    out = token_prompter_w_pos_forward(prompt, pos_embedding, **kwargs)
    out = jax.block_until_ready(out)

    ref = prompt + pos_embedding
    assert out.shape == (1, prompt_len, HIDDEN)
    assert jnp.allclose(out, ref, atol=1e-6, rtol=1e-6)


if __name__ == "__main__":
    key = jax.random.PRNGKey(0)
    k0, k1, k2, k3 = jax.random.split(key, 4)

    # Small shape consistent with the module -> small-L fast path (XLA add).
    _check(prompt_len=8, key=k0)
    # Same small shape, kernel path forced (single full-extent block).
    _check(prompt_len=8, key=k1, small_l_threshold=0)
    # Non-divisible length exercises the cdiv grid + masked ragged last tile.
    _check(prompt_len=1000, key=k2)
    # Aligned multi-tile pipelined path (grid of 4, tm=512).
    _check(prompt_len=2048, key=k3)

    print("KERNEL_OK")
</pallas_src>

<mosaic_0001>
module attributes {stable_mosaic.version = 11 : i64} {
  func.func @_prompt_add_kernel(%arg0: i32, %arg1: memref<8x768xf32, #tpu.memory_space<vmem>>, %arg2: memref<8x1xf32, #tpu.memory_space<vmem>>, %arg3: memref<8x768xf32, #tpu.memory_space<vmem>>) attributes {dimension_semantics = [#tpu.dimension_semantics<parallel>], iteration_bounds = array<i64: 1>, scalar_prefetch = 0 : i64, scratch_operands = 0 : i64, tpu.core_type = #tpu.core_type<tc>, window_params = [{transform_indices = @transform_0, window_bounds = array<i64: 8, 768>}, {transform_indices = @transform_1, window_bounds = array<i64: 8, 1>}, {transform_indices = @transform_2, window_bounds = array<i64: 8, 768>}]} {
    %c0 = arith.constant 0 : index
    %c0_0 = arith.constant 0 : index
    %0 = vector.load %arg1[%c0, %c0_0] : memref<8x768xf32, #tpu.memory_space<vmem>>, vector<8x768xf32>
    %c0_1 = arith.constant 0 : index
    %c0_2 = arith.constant 0 : index
    %1 = vector.load %arg2[%c0_1, %c0_2] : memref<8x1xf32, #tpu.memory_space<vmem>>, vector<8x1xf32>
    %2 = vector.broadcast %1 : vector<8x1xf32> to vector<8x768xf32>
    %3 = arith.addf %0, %2 : vector<8x768xf32>
    %c0_3 = arith.constant 0 : index
    %c0_4 = arith.constant 0 : index
    %4 = vector.load %arg3[%c0_3, %c0_4] : memref<8x768xf32, #tpu.memory_space<vmem>>, vector<8x768xf32>
    tpu.vector_store %arg3[%c0_3, %c0_4], %3 {strides = array<i32>} : memref<8x768xf32, #tpu.memory_space<vmem>>, vector<8x768xf32>,
    return
  }
  func.func @transform_0(%arg0: i32) -> (i32, i32) {
    %c0_i32 = arith.constant 0 : i32
    %c0_i32_0 = arith.constant 0 : i32
    return %arg0, %c0_i32 : i32, i32
  }
  func.func @transform_1(%arg0: i32) -> (i32, i32) {
    %c0_i32 = arith.constant 0 : i32
    %c0_i32_0 = arith.constant 0 : i32
    return %arg0, %c0_i32 : i32, i32
  }
  func.func @transform_2(%arg0: i32) -> (i32, i32) {
    %c0_i32 = arith.constant 0 : i32
    %c0_i32_0 = arith.constant 0 : i32
    return %arg0, %c0_i32 : i32, i32
  }
}

</mosaic_0001>

<llo_original>
// kernel: tpu_custom_call.1
$region0: #{tpu_custom_call.1}
  #allocation0 [shape = 'u32[]', space=smem, size = 0x4, offset = 0x4, fixed_abs, tag = 'smem constant byte address 0x4 - core index']
  #allocation1 [shape = 'u32[144,128]{1,0:T(1,128)}', space=vmem, size = 0x12000, scoped, tag = 'internal scratch']
  %s0 = inlined_call_operand.hbm [shape: f32[8,768], index: 0, kind: input, shape index: {}]
  %s1 = inlined_call_operand.vmem [shape: f32[8,1], index: 1, kind: input, shape index: {}]
  %s2 = inlined_call_operand.hbm [shape: f32[8,768], index: 2, kind: output, shape index: {}]
  %s3 = sld [smem:[#allocation0]]
  $region22: #{tpu_custom_call.1} parent=0
    _
  %s5 = ssub.s32 1, %s3
  %s6 = scalar_select 0, %s5, %s3
  $region1: #{tpu_custom_call.1} parent=0
    #allocation2 [shape = 'u8[24576]{0}', space=vmem, size = 0x6000, scoped, tag = 'input window, operand 0, single buffered']
    #allocation3 [shape = 's32[1]{0}', space=sflag, size = 0x4, scoped, tag = 'scoped memory for tpu_custom_call.1']
    #allocation4 [shape = 's32[1]{0}', space=sflag, size = 0x4, scoped, tag = 'scoped memory for tpu_custom_call.1']
    #allocation5 [shape = 'u8[24576]{0}', space=vmem, size = 0x6000, scoped, tag = 'output window, operand 0, single buffered']
    %7 = vsyncpa [#allocation3], 0
    %8 = vsyncpa [#allocation4], 0
    // Predicated region
    $region2: #{tpu_custom_call.1} parent=1 // pred_check
      _
    $region3: #{tpu_custom_call.1} parent=1 // pred_check_branch
      %10 = sbr.rel (0) target = $region5
    $region4: #{tpu_custom_call.1} parent=1 // pred_region
      %s12 = ssub.s32 768, 768
      %13 = vsyncadd [#allocation3], %s12
      %s15 = sshll.u32 [#allocation2], 4
      %s16 = int_to_ptr.vmem [resolvable:$true] %s15
      %18 = dma.hbm_to_vmem [thread:$0]  %s0, 768, %s16, [#allocation3]
    $region5: #{tpu_custom_call.1} parent=1 // pred_fallthru
      _
    // Predicated region
    $region6: #{tpu_custom_call.1} parent=1 // pred_check
      _
    $region7: #{tpu_custom_call.1} parent=1 // pred_check_branch
      %20 = sbr.rel (0) target = $region9
    $region8: #{tpu_custom_call.1} parent=1 // pred_region
      _
    $region9: #{tpu_custom_call.1} parent=1 // pred_fallthru
      _
    // Predicated region
    $region10: #{tpu_custom_call.1} parent=1 // pred_check
      _
    $region11: #{tpu_custom_call.1} parent=1 // pred_check_branch
      %22 = sbr.rel (0) target = $region13
    $region12: #{tpu_custom_call.1} parent=1 // pred_region
      %23 = dma.done [#allocation3], 768
    $region13: #{tpu_custom_call.1} parent=1 // pred_fallthru
      _
    %v24 = vld [vmem:[#allocation2] sm:$0xff]
    %v25 = vld [vmem:[#allocation2 + $0x8] sm:$0xff]
    %v26 = vld [vmem:[#allocation2 + $0x10] sm:$0xff]
    %v27 = vld [vmem:[#allocation2 + $0x18] sm:$0xff]
    %v28 = vld [vmem:[#allocation2 + $0x20] sm:$0xff]
    %v29 = vld [vmem:[#allocation2 + $0x28] sm:$0xff]
    %v30 = vld [vmem:[%s1] sm:$0xff]
    %32 = vset.pattern.permute.xlu0 0
    %33 = vperm.xlu0 %32, %v30
    %v34 = vpop.permute.xlu0 %33
    %v36 = vadd.f32 %v24, %v34
    %v37 = vadd.f32 %v25, %v34
    %v38 = vadd.f32 %v26, %v34
    %v39 = vadd.f32 %v27, %v34
    %v40 = vadd.f32 %v28, %v34
    %v41 = vadd.f32 %v29, %v34
    %42 = vst [vmem:[#allocation5] sm:$0xff] %v36
    %43 = vst [vmem:[#allocation5 + $0x8] sm:$0xff] %v37
    %44 = vst [vmem:[#allocation5 + $0x10] sm:$0xff] %v38
    %45 = vst [vmem:[#allocation5 + $0x18] sm:$0xff] %v39
    %46 = vst [vmem:[#allocation5 + $0x20] sm:$0xff] %v40
    %47 = vst [vmem:[#allocation5 + $0x28] sm:$0xff] %v41
    // Predicated region
    $region14: #{tpu_custom_call.1} parent=1 // pred_check
      _
    $region15: #{tpu_custom_call.1} parent=1 // pred_check_branch
      %49 = sbr.rel (0) target = $region17
    $region16: #{tpu_custom_call.1} parent=1 // pred_region
      %s51 = ssub.s32 768, 768
      %52 = vsyncadd [#allocation4], %s51
      %s54 = sshll.u32 [#allocation5], 4
      %s55 = int_to_ptr.vmem [resolvable:$true] %s54
      %57 = dma.vmem_to_hbm [thread:$0]  %s55, 768, %s2, [#allocation4]
    $region17: #{tpu_custom_call.1} parent=1 // pred_fallthru
      _
    // Predicated region
    $region18: #{tpu_custom_call.1} parent=1 // pred_check
      _
    $region19: #{tpu_custom_call.1} parent=1 // pred_check_branch
      %59 = sbr.rel (0) target = $region21
    $region20: #{tpu_custom_call.1} parent=1 // pred_region
      %60 = dma.done [#allocation4], 768
    $region21: #{tpu_custom_call.1} parent=1 // pred_fallthru
      _
    %61 = vsyncpa [#allocation3], 1
    %62 = vsyncpa [#allocation4], 1

</llo_original>
